<compile_context>
chip_gen: v7x
topology: tpu7x:2x2x1
jax: 0.10.0
libtpu: 0.0.40
codegen_flags: <defaults>
</compile_context>

<pallas_src>
import functools

import jax
import jax.numpy as jnp
from jax.experimental import pallas as pl
from jax.experimental.pallas import tpu as pltpu

_LANE = 128
_BF16_SUBLANE = 16  # one bf16 vreg holds [16, 128]


def _round_up(x, m):
    return (x + m - 1) // m * m


# ---------------------------------------------------------------------------
# Kernel: the whole decoder on one batch tile. Intermediates stay in VMEM/vregs.
# ---------------------------------------------------------------------------
def _decoder_kernel(*refs, num_layers):
    """refs layout: [x, w_0..w_{L-1}, b_0..b_{L-1}, out].

    x: caller dtype (cast to bf16 in-kernel); w_i: bf16 (MXU inputs);
    b_i: f32. The MXU accumulates in f32; bias + ReLU run on the f32
    accumulator (epilogue); the activation is re-cast to bf16 for the next
    layer's matmul. The Python layer loop unrolls at trace time.
    """
    x_ref = refs[0]
    w_refs = refs[1:1 + num_layers]
    b_refs = refs[1 + num_layers:1 + 2 * num_layers]
    o_ref = refs[1 + 2 * num_layers]

    h = x_ref[...].astype(w_refs[0].dtype)             # (TB, K0) bf16
    acc = None
    for i in range(num_layers):
        acc = jnp.dot(h, w_refs[i][...],
                      preferred_element_type=jnp.float32)
        acc = acc + b_refs[i][...]                      # f32 epilogue (bias)
        if i != num_layers - 1:
            # TODO(synk): inner activation assumed ReLU.
            acc = jnp.maximum(acc, 0.0)
            h = acc.astype(w_refs[i + 1].dtype)         # bf16 for next MXU pass
    o_ref[...] = acc.astype(o_ref.dtype)


# ---------------------------------------------------------------------------
# One-time parameter prep (NOT per forward call)
# ---------------------------------------------------------------------------
def prepare_decoder_params(weights, biases, compute_dtype=jnp.bfloat16):
    """Transpose PyTorch-layout (out,in) weights to (in,out) for x @ W,
    zero-pad out-features to multiples of 128 (lane-dense MXU + stores),
    zero-pad the K dim of layer i>0 to the previous layer's padded width
    (layer 0 keeps its raw K so x needs no feature padding at call time),
    and cast to bf16 (accumulation stays f32 in-kernel).

    Returns (padded_weights, padded_biases, logical_dims).

    TODO(synk): on v7x an fp8(e4m3) weight cast would halve resident VMEM and
    ~2x MXU throughput; kept bf16 here (numerics-gated; not valid on v5e/v6e).
    """
    prepped_w, prepped_b, dims = [], [], []
    prev_out_pad = None
    for li, (w, b) in enumerate(zip(weights, biases)):
        out_f, in_f = w.shape
        if li == 0:
            in_p = in_f                              # matches raw x feature dim
        else:
            assert in_f == dims[-1][1], "decoder layers must chain"
            in_p = prev_out_pad                      # previous layer's padded N
        out_p = _round_up(out_f, _LANE)
        w_t = jnp.zeros((in_p, out_p), compute_dtype)
        w_t = w_t.at[:in_f, :out_f].set(jnp.transpose(w).astype(compute_dtype))
        b_p = jnp.zeros((1, out_p), jnp.float32)
        b_p = b_p.at[0, :out_f].set(b.astype(jnp.float32))
        prepped_w.append(w_t)
        prepped_b.append(b_p)
        dims.append((in_f, out_f))
        prev_out_pad = out_p
    return prepped_w, prepped_b, dims


# ---------------------------------------------------------------------------
# Tiling / VMEM heuristics
# ---------------------------------------------------------------------------
def _vmem_cap_bytes():
    """Per-generation VMEM budget: physical capacity minus headroom for Mosaic
    internal scratch and pipeline buffers (~52 MiB of v7x's 64 MiB, ~107 MiB of
    v5e/v6e's 128 MiB).  Falls back to the most conservative (v7x) figure."""
    phys = 64 * 1024 * 1024
    try:
        phys = int(pltpu.get_tpu_info().vmem_capacity_bytes)
    except Exception:  # noqa: BLE001  (older jax / query unavailable)
        pass
    return phys - max(phys // 6, 12 * 1024 * 1024)


def _choose_batch_tile(B, batch_tile):
    """Rows per grid step: a multiple of 16 (bf16 sublane packing), never
    larger than the batch (so blocks never exceed the array), and at least two
    grid steps whenever the batch allows so both v7x TensorCores get work (the
    extra ~0.35us grid step is noise on single-TC v5e/v6e)."""
    if B < 2 * _BF16_SUBLANE:
        return B                       # one exact block (block == array dims)
    tb = min(batch_tile, (B // _BF16_SUBLANE) * _BF16_SUBLANE)
    if pl.cdiv(B, tb) < 2:
        half = _round_up(pl.cdiv(B, 2), _BF16_SUBLANE)
        tb = min(half, (B // _BF16_SUBLANE) * _BF16_SUBLANE)
    return tb


# ---------------------------------------------------------------------------
# Fused forward
# ---------------------------------------------------------------------------
def decoder_fc_forward(x, prepped_w, prepped_b, dims, *, batch_tile=256,
                       out_dtype=None):
    """x -> Linear -> ReLU -> ... -> Linear (no activation on last layer),
    all inside a single pallas_call.

    batch_tile: rows per grid step (default 256; >256 with very wide hidden
    layers can spill the f32 accumulator on v5e's single vector-store slot).
    out_dtype: output dtype; default x.dtype (f32 matches PyTorch .float()),
    pass jnp.bfloat16 to halve HBM writeback when downstream allows it.
    """
    num_layers = len(prepped_w)
    assert num_layers >= 1
    B, in_f = x.shape
    assert in_f == dims[0][0], "x feature dim must match decoder input_dim"
    out_f = dims[-1][1]
    out_pad = prepped_w[-1].shape[1]
    out_dtype = jnp.dtype(x.dtype) if out_dtype is None else jnp.dtype(out_dtype)

    tb = _choose_batch_tile(B, batch_tile)
    grid = (pl.cdiv(B, tb),)

    # --- VMEM budget (single-buffered weights + double-buffered x/out tiles +
    #     live f32 accumulator / bf16 activation), checked per generation.
    cap = _vmem_cap_bytes()
    w_bytes = sum(int(w.size) * w.dtype.itemsize for w in prepped_w)
    b_bytes = sum(int(b.size) * b.dtype.itemsize for b in prepped_b)
    io_bytes = (2 * tb * in_f * x.dtype.itemsize
                + 2 * tb * out_pad * out_dtype.itemsize)
    max_np = max(w.shape[1] for w in prepped_w)
    live_bytes = 2 * tb * max_np * (4 + 2)      # f32 acc + bf16 h (+ spill slack)
    vmem_est = w_bytes + b_bytes + io_bytes + live_bytes
    if vmem_est > cap:
        # TODO(synk): K/N-tiled GEMM path (weights stationary, batch innermost)
        # for decoders whose single-buffered weights exceed the VMEM budget.
        raise NotImplementedError(
            f"decoder needs ~{vmem_est >> 20} MiB VMEM (budget {cap >> 20} MiB); "
            "K/N tiling path not implemented")
    vmem_limit = int(min(cap, max(2 * vmem_est, 16 * 1024 * 1024)))

    # Cost estimate: lets XLA schedule surrounding producers around the call.
    flops = sum(2 * B * w.shape[0] * w.shape[1] for w in prepped_w)
    bytes_accessed = (int(x.size) * x.dtype.itemsize
                      + B * out_pad * out_dtype.itemsize + w_bytes + b_bytes)

    kernel = functools.partial(_decoder_kernel, num_layers=num_layers)
    out_shape = jax.ShapeDtypeStruct((B, out_pad), out_dtype)
    out_specs = pl.BlockSpec((tb, out_pad), lambda i: (i, 0))

    def build_in_specs(single_buffer):
        # Weights/biases never change with the grid index -> single buffer.
        kw = {"pipeline_mode": pl.Buffered(1)} if single_buffer else {}
        specs = [pl.BlockSpec((tb, in_f), lambda i: (i, 0))]
        for w in prepped_w:
            specs.append(pl.BlockSpec(w.shape, lambda i: (0, 0), **kw))
        for b in prepped_b:
            specs.append(pl.BlockSpec(b.shape, lambda i: (0, 0), **kw))
        return specs

    out_p = None
    for single_buffer in (True, False):
        try:
            out_p = pl.pallas_call(
                kernel,
                out_shape=out_shape,
                grid=grid,
                in_specs=build_in_specs(single_buffer),
                out_specs=out_specs,
                compiler_params=pltpu.CompilerParams(
                    dimension_semantics=("parallel",),
                    vmem_limit_bytes=vmem_limit),
                cost_estimate=pl.CostEstimate(
                    flops=flops, transcendentals=0,
                    bytes_accessed=bytes_accessed),
            )(x, *prepped_w, *prepped_b)
            break
        except Exception:  # noqa: BLE001
            if not single_buffer:
                raise
            # This jax build rejected single-buffered (Buffered(1)) weight
            # blocks; retry with default double buffering (known-good config).
            continue

    if out_pad != out_f:
        out_p = out_p[:, :out_f]
    return out_p


# ---------------------------------------------------------------------------
# Param init + pure-JAX references
# ---------------------------------------------------------------------------
def init_decoder_params(key, encoder_layer_dims):
    """encoder_layer_dims: list of (out_features, in_features) of the *encoder*
    Linear layers, in encoder order. Decoder layer i is
    Linear(enc[-i-1].out, enc[-i-1].in), i.e. in/out swapped, reversed order,
    exactly as Decoder_FC builds it."""
    weights, biases = [], []
    for i in range(len(encoder_layer_dims)):
        enc_out, enc_in = encoder_layer_dims[-i - 1]
        in_f, out_f = enc_out, enc_in              # decoder Linear(in_f, out_f)
        key, kw, kb = jax.random.split(key, 3)
        bound = 1.0 / jnp.sqrt(in_f)
        # PyTorch nn.Linear stores weight as (out_features, in_features)
        w = jax.random.uniform(kw, (out_f, in_f), jnp.float32, -bound, bound)
        b = jax.random.uniform(kb, (out_f,), jnp.float32, -bound, bound)
        weights.append(w)
        biases.append(b)
    return weights, biases


def reference_forward_f32(x, weights, biases):
    """Pure-JAX f32 reference of the PyTorch forward (semantics check)."""
    x = x.astype(jnp.float32)
    n = len(weights)
    for i in range(n):
        x = x @ weights[i].T.astype(jnp.float32) + biases[i].astype(jnp.float32)
        if i != n - 1:
            x = jnp.maximum(x, 0.0)
    return x


def reference_forward_policy(x, weights, biases):
    """Pure-JAX reference using the same bf16-in / f32-accumulate policy as the
    kernel (numerics check)."""
    h = x.astype(jnp.bfloat16)
    n = len(weights)
    acc = None
    for i in range(n):
        acc = jnp.dot(h, jnp.transpose(weights[i]).astype(jnp.bfloat16),
                      preferred_element_type=jnp.float32)
        acc = acc + biases[i].astype(jnp.float32)
        if i != n - 1:
            acc = jnp.maximum(acc, 0.0)
            h = acc.astype(jnp.bfloat16)
    return acc


if __name__ == "__main__":
    key = jax.random.PRNGKey(0)

    # Synthetic encoder: 32 -> 16 -> 8 (encoder Linear dims given as (out, in)).
    # => Decoder mirrors it: Linear(8, 16) -> ReLU -> Linear(16, 32)
    encoder_layer_dims = [(16, 32), (8, 16)]
    key, kp, kx = jax.random.split(key, 3)
    weights, biases = init_decoder_params(kp, encoder_layer_dims)

    # One-time parameter prep (transpose + pad + bf16 cast).
    pw, pb, dims = prepare_decoder_params(weights, biases)

    # --- small-batch case: single exact block ------------------------------
    batch = 8
    latent_dim = encoder_layer_dims[-1][0]          # decoder input_dim = 8
    x = jax.random.normal(kx, (batch, latent_dim), jnp.float32)

    out = decoder_fc_forward(x, pw, pb, dims)
    out = jax.block_until_ready(out)

    ref_policy = reference_forward_policy(x, weights, biases)
    ref_f32 = reference_forward_f32(x, weights, biases)

    assert out.shape == (batch, encoder_layer_dims[0][1])   # (8, 32)
    assert out.dtype == x.dtype
    # Exact-policy check (same bf16/f32 mixed precision as the kernel).
    assert jnp.allclose(out, ref_policy, atol=1e-3, rtol=1e-3), \
        float(jnp.max(jnp.abs(out - ref_policy)))
    # Semantics check vs full-f32 PyTorch-equivalent forward (bf16 tolerance).
    assert jnp.allclose(out, ref_f32, atol=1e-1, rtol=1e-1), \
        float(jnp.max(jnp.abs(out - ref_f32)))

    # --- bigger batch: exercises >=2 grid steps + masked tail block ---------
    key, kx2 = jax.random.split(key)
    x2 = jax.random.normal(kx2, (40, latent_dim), jnp.float32)
    out2 = jax.block_until_ready(decoder_fc_forward(x2, pw, pb, dims))
    ref2 = reference_forward_f32(x2, weights, biases)
    assert out2.shape == (40, encoder_layer_dims[0][1])
    assert jnp.allclose(out2, ref2, atol=1e-1, rtol=1e-1), \
        float(jnp.max(jnp.abs(out2 - ref2)))

    print("KERNEL_OK")
</pallas_src>

<mosaic_0001>
module attributes {stable_mosaic.version = 11 : i64} {
  func.func @_decoder_kernel(%arg0: i32, %arg1: memref<8x8xf32, #tpu.memory_space<vmem>>, %arg2: memref<8x128xbf16, #tpu.memory_space<vmem>>, %arg3: memref<128x128xbf16, #tpu.memory_space<vmem>>, %arg4: memref<1x128xf32, #tpu.memory_space<vmem>>, %arg5: memref<1x128xf32, #tpu.memory_space<vmem>>, %arg6: memref<8x128xf32, #tpu.memory_space<vmem>>) attributes {dimension_semantics = [#tpu.dimension_semantics<parallel>], iteration_bounds = array<i64: 1>, scalar_prefetch = 0 : i64, scratch_operands = 0 : i64, tpu.core_type = #tpu.core_type<tc>, window_params = [{transform_indices = @transform_0, window_bounds = array<i64: 8, 8>}, {pipeline_mode = #tpu.pipeline_mode<synchronous>, transform_indices = @transform_1, window_bounds = array<i64: 8, 128>}, {pipeline_mode = #tpu.pipeline_mode<synchronous>, transform_indices = @transform_2, window_bounds = array<i64: 128, 128>}, {pipeline_mode = #tpu.pipeline_mode<synchronous>, transform_indices = @transform_3, window_bounds = array<i64: 1, 128>}, {pipeline_mode = #tpu.pipeline_mode<synchronous>, transform_indices = @transform_4, window_bounds = array<i64: 1, 128>}, {transform_indices = @transform_5, window_bounds = array<i64: 8, 128>}]} {
    %c0 = arith.constant 0 : index
    %c0_0 = arith.constant 0 : index
    %0 = vector.load %arg1[%c0, %c0_0] : memref<8x8xf32, #tpu.memory_space<vmem>>, vector<8x8xf32>
    %1 = arith.truncf %0 : vector<8x8xf32> to vector<8x8xbf16>
    %c0_1 = arith.constant 0 : index
    %c0_2 = arith.constant 0 : index
    %2 = vector.load %arg2[%c0_1, %c0_2] : memref<8x128xbf16, #tpu.memory_space<vmem>>, vector<8x128xbf16>
    %cst = arith.constant dense<0.000000e+00> : vector<8x128xf32>
    %3 = tpu.matmul %1, %2, %cst {dimension_numbers = #tpu.dot_dimension_numbers<[1], [0], [0], [1], [0, 0, 1, 1], [], []>} : vector<8x8xbf16>, vector<8x128xbf16>, vector<8x128xf32> -> vector<8x128xf32>
    %c0_3 = arith.constant 0 : index
    %c0_4 = arith.constant 0 : index
    %4 = vector.load %arg4[%c0_3, %c0_4] : memref<1x128xf32, #tpu.memory_space<vmem>>, vector<1x128xf32>
    %5 = vector.broadcast %4 : vector<1x128xf32> to vector<8x128xf32>
    %6 = arith.addf %3, %5 : vector<8x128xf32>
    %cst_5 = arith.constant 0.000000e+00 : f32
    %7 = vector.broadcast %cst_5 : f32 to vector<8x128xf32>
    %8 = arith.maximumf %6, %7 : vector<8x128xf32>
    %9 = arith.truncf %8 : vector<8x128xf32> to vector<8x128xbf16>
    %c0_6 = arith.constant 0 : index
    %c0_7 = arith.constant 0 : index
    %10 = vector.load %arg3[%c0_6, %c0_7] : memref<128x128xbf16, #tpu.memory_space<vmem>>, vector<128x128xbf16>
    %cst_8 = arith.constant dense<0.000000e+00> : vector<8x128xf32>
    %11 = tpu.matmul %9, %10, %cst_8 {dimension_numbers = #tpu.dot_dimension_numbers<[1], [0], [0], [1], [0, 0, 1, 1], [], []>} : vector<8x128xbf16>, vector<128x128xbf16>, vector<8x128xf32> -> vector<8x128xf32>
    %c0_9 = arith.constant 0 : index
    %c0_10 = arith.constant 0 : index
    %12 = vector.load %arg5[%c0_9, %c0_10] : memref<1x128xf32, #tpu.memory_space<vmem>>, vector<1x128xf32>
    %13 = vector.broadcast %12 : vector<1x128xf32> to vector<8x128xf32>
    %14 = arith.addf %11, %13 : vector<8x128xf32>
    %c0_11 = arith.constant 0 : index
    %c0_12 = arith.constant 0 : index
    %15 = vector.load %arg6[%c0_11, %c0_12] : memref<8x128xf32, #tpu.memory_space<vmem>>, vector<8x128xf32>
    tpu.vector_store %arg6[%c0_11, %c0_12], %14 {strides = array<i32>} : memref<8x128xf32, #tpu.memory_space<vmem>>, vector<8x128xf32>,
    return
  }
  func.func @transform_0(%arg0: i32) -> (i32, i32) {
    %c0_i32 = arith.constant 0 : i32
    %c0_i32_0 = arith.constant 0 : i32
    return %arg0, %c0_i32 : i32, i32
  }
  func.func @transform_1(%arg0: i32) -> (i32, i32) {
    %c0_i32 = arith.constant 0 : i32
    %c0_i32_0 = arith.constant 0 : i32
    %c0_i32_1 = arith.constant 0 : i32
    return %c0_i32, %c0_i32_0 : i32, i32
  }
  func.func @transform_2(%arg0: i32) -> (i32, i32) {
    %c0_i32 = arith.constant 0 : i32
    %c0_i32_0 = arith.constant 0 : i32
    %c0_i32_1 = arith.constant 0 : i32
    return %c0_i32, %c0_i32_0 : i32, i32
  }
  func.func @transform_3(%arg0: i32) -> (i32, i32) {
    %c0_i32 = arith.constant 0 : i32
    %c0_i32_0 = arith.constant 0 : i32
    %c0_i32_1 = arith.constant 0 : i32
    return %c0_i32, %c0_i32_0 : i32, i32
  }
  func.func @transform_4(%arg0: i32) -> (i32, i32) {
    %c0_i32 = arith.constant 0 : i32
    %c0_i32_0 = arith.constant 0 : i32
    %c0_i32_1 = arith.constant 0 : i32
    return %c0_i32, %c0_i32_0 : i32, i32
  }
  func.func @transform_5(%arg0: i32) -> (i32, i32) {
    %c0_i32 = arith.constant 0 : i32
    %c0_i32_0 = arith.constant 0 : i32
    return %arg0, %c0_i32 : i32, i32
  }
}

module attributes {stable_mosaic.version = 11 : i64} {
  func.func @_decoder_kernel(%arg0: i32, %arg1: memref<8x8xf32, #tpu.memory_space<vmem>>, %arg2: memref<8x128xbf16, #tpu.memory_space<vmem>>, %arg3: memref<128x128xbf16, #tpu.memory_space<vmem>>, %arg4: memref<1x128xf32, #tpu.memory_space<vmem>>, %arg5: memref<1x128xf32, #tpu.memory_space<vmem>>, %arg6: memref<8x128xf32, #tpu.memory_space<vmem>>) attributes {dimension_semantics = [#tpu.dimension_semantics<parallel>], iteration_bounds = array<i64: 1>, scalar_prefetch = 0 : i64, scratch_operands = 0 : i64, tpu.core_type = #tpu.core_type<tc>, window_params = [{transform_indices = @transform_0, window_bounds = array<i64: 8, 8>}, {pipeline_mode = #tpu.pipeline_mode<synchronous>, transform_indices = @transform_1, window_bounds = array<i64: 8, 128>}, {pipeline_mode = #tpu.pipeline_mode<synchronous>, transform_indices = @transform_2, window_bounds = array<i64: 128, 128>}, {pipeline_mode = #tpu.pipeline_mode<synchronous>, transform_indices = @transform_3, window_bounds = array<i64: 1, 128>}, {pipeline_mode = #tpu.pipeline_mode<synchronous>, transform_indices = @transform_4, window_bounds = array<i64: 1, 128>}, {transform_indices = @transform_5, window_bounds = array<i64: 8, 128>}]} {
    %c0 = arith.constant 0 : index
    %c0_0 = arith.constant 0 : index
    %0 = vector.load %arg1[%c0, %c0_0] : memref<8x8xf32, #tpu.memory_space<vmem>>, vector<8x8xf32>
    %1 = arith.truncf %0 : vector<8x8xf32> to vector<8x8xbf16>
    %c0_1 = arith.constant 0 : index
    %c0_2 = arith.constant 0 : index
    %2 = vector.load %arg2[%c0_1, %c0_2] : memref<8x128xbf16, #tpu.memory_space<vmem>>, vector<8x128xbf16>
    %cst = arith.constant dense<0.000000e+00> : vector<8x128xf32>
    %3 = tpu.matmul %1, %2, %cst {dimension_numbers = #tpu.dot_dimension_numbers<[1], [0], [0], [1], [0, 0, 1, 1], [], []>} : vector<8x8xbf16>, vector<8x128xbf16>, vector<8x128xf32> -> vector<8x128xf32>
    %c0_3 = arith.constant 0 : index
    %c0_4 = arith.constant 0 : index
    %4 = vector.load %arg4[%c0_3, %c0_4] : memref<1x128xf32, #tpu.memory_space<vmem>>, vector<1x128xf32>
    %5 = vector.broadcast %4 : vector<1x128xf32> to vector<8x128xf32>
    %6 = arith.addf %3, %5 : vector<8x128xf32>
    %cst_5 = arith.constant 0.000000e+00 : f32
    %7 = vector.broadcast %cst_5 : f32 to vector<8x128xf32>
    %8 = arith.maximumf %6, %7 : vector<8x128xf32>
    %9 = arith.truncf %8 : vector<8x128xf32> to vector<8x128xbf16>
    %c0_6 = arith.constant 0 : index
    %c0_7 = arith.constant 0 : index
    %10 = vector.load %arg3[%c0_6, %c0_7] : memref<128x128xbf16, #tpu.memory_space<vmem>>, vector<128x128xbf16>
    %cst_8 = arith.constant dense<0.000000e+00> : vector<8x128xf32>
    %11 = tpu.matmul %9, %10, %cst_8 {dimension_numbers = #tpu.dot_dimension_numbers<[1], [0], [0], [1], [0, 0, 1, 1], [], []>} : vector<8x128xbf16>, vector<128x128xbf16>, vector<8x128xf32> -> vector<8x128xf32>
    %c0_9 = arith.constant 0 : index
    %c0_10 = arith.constant 0 : index
    %12 = vector.load %arg5[%c0_9, %c0_10] : memref<1x128xf32, #tpu.memory_space<vmem>>, vector<1x128xf32>
    %13 = vector.broadcast %12 : vector<1x128xf32> to vector<8x128xf32>
    %14 = arith.addf %11, %13 : vector<8x128xf32>
    %c0_11 = arith.constant 0 : index
    %c0_12 = arith.constant 0 : index
    %15 = vector.load %arg6[%c0_11, %c0_12] : memref<8x128xf32, #tpu.memory_space<vmem>>, vector<8x128xf32>
    tpu.vector_store %arg6[%c0_11, %c0_12], %14 {strides = array<i32>} : memref<8x128xf32, #tpu.memory_space<vmem>>, vector<8x128xf32>,
    return
  }
  func.func @transform_0(%arg0: i32) -> (i32, i32) {
    %c0_i32 = arith.constant 0 : i32
    %c0_i32_0 = arith.constant 0 : i32
    return %arg0, %c0_i32 : i32, i32
  }
  func.func @transform_1(%arg0: i32) -> (i32, i32) {
    %c0_i32 = arith.constant 0 : i32
    %c0_i32_0 = arith.constant 0 : i32
    %c0_i32_1 = arith.constant 0 : i32
    return %c0_i32, %c0_i32_0 : i32, i32
  }
  func.func @transform_2(%arg0: i32) -> (i32, i32) {
    %c0_i32 = arith.constant 0 : i32
    %c0_i32_0 = arith.constant 0 : i32
    %c0_i32_1 = arith.constant 0 : i32
    return %c0_i32, %c0_i32_0 : i32, i32
  }
  func.func @transform_3(%arg0: i32) -> (i32, i32) {
    %c0_i32 = arith.constant 0 : i32
    %c0_i32_0 = arith.constant 0 : i32
    %c0_i32_1 = arith.constant 0 : i32
    return %c0_i32, %c0_i32_0 : i32, i32
  }
  func.func @transform_4(%arg0: i32) -> (i32, i32) {
    %c0_i32 = arith.constant 0 : i32
    %c0_i32_0 = arith.constant 0 : i32
    %c0_i32_1 = arith.constant 0 : i32
    return %c0_i32, %c0_i32_0 : i32, i32
  }
  func.func @transform_5(%arg0: i32) -> (i32, i32) {
    %c0_i32 = arith.constant 0 : i32
    %c0_i32_0 = arith.constant 0 : i32
    return %arg0, %c0_i32 : i32, i32
  }
}

</mosaic_0001>

<llo_original>
// kernel: tpu_custom_call.1
$region0: #{tpu_custom_call.1}
  #allocation0 [shape = 'u32[]', space=smem, size = 0x4, offset = 0x4, fixed_abs, tag = 'smem constant byte address 0x4 - core index']
  #allocation1 [shape = 'u32[144,128]{1,0:T(1,128)}', space=vmem, size = 0x12000, scoped, tag = 'internal scratch']
  %s0 = inlined_call_operand.hbm [shape: f32[8,8], index: 0, kind: input, shape index: {}]
  %s1 = inlined_call_operand.hbm [shape: bf16[8,128], index: 1, kind: input, shape index: {}]
  %s2 = inlined_call_operand.hbm [shape: bf16[128,128], index: 2, kind: input, shape index: {}]
  %s3 = inlined_call_operand.vmem [shape: f32[1,128], index: 3, kind: input, shape index: {}]
  %s4 = inlined_call_operand.vmem [shape: f32[1,128], index: 4, kind: input, shape index: {}]
  %s5 = inlined_call_operand.hbm [shape: f32[8,128], index: 5, kind: output, shape index: {}]
  %s6 = sld [smem:[#allocation0]]
  $region42: #{tpu_custom_call.1} parent=0
    _
  %s8 = ssub.s32 1, %s6
  %s9 = scalar_select 0, %s8, %s6
  $region1: #{tpu_custom_call.1} parent=0
    #allocation2 [shape = 'u8[4096]{0}', space=vmem, size = 0x1000, scoped, tag = 'input window, operand 0, single buffered']
    #allocation3 [shape = 's32[1]{0}', space=sflag, size = 0x4, scoped, tag = 'scoped memory for tpu_custom_call.1']
    #allocation4 [shape = 's32[1]{0}', space=sflag, size = 0x4, scoped, tag = 'scoped memory for tpu_custom_call.1']
    #allocation5 [shape = 'u8[2048]{0}', space=vmem, size = 0x800, scoped, tag = 'input window, operand 1, single buffered']
    #allocation6 [shape = 's32[1]{0}', space=sflag, size = 0x4, scoped, tag = 'scoped memory for tpu_custom_call.1']
    #allocation7 [shape = 'u8[32768]{0}', space=vmem, size = 0x8000, scoped, tag = 'input window, operand 2, single buffered']
    #allocation8 [shape = 'u8[4096]{0}', space=vmem, size = 0x1000, scoped, tag = 'output window, operand 0, single buffered']
    %10 = vsyncpa [#allocation3], 0
    %11 = vsyncpa [#allocation6], 0
    %12 = vsyncpa [#allocation4], 0
    // Predicated region
    $region2: #{tpu_custom_call.1} parent=1 // pred_check
      _
    $region3: #{tpu_custom_call.1} parent=1 // pred_check_branch
      %14 = sbr.rel (0) target = $region5
    $region4: #{tpu_custom_call.1} parent=1 // pred_region
      %s16 = ssub.s32 128, 128
      %17 = vsyncadd [#allocation3], %s16
      %s19 = sshll.u32 [#allocation2], 4
      %s20 = int_to_ptr.vmem [resolvable:$true] %s19
      %22 = dma.hbm_to_vmem [thread:$0]  %s0, 128, %s20, [#allocation3]
    $region5: #{tpu_custom_call.1} parent=1 // pred_fallthru
      _
    // Predicated region
    $region6: #{tpu_custom_call.1} parent=1 // pred_check
      _
    $region7: #{tpu_custom_call.1} parent=1 // pred_check_branch
      %24 = sbr.rel (0) target = $region9
    $region8: #{tpu_custom_call.1} parent=1 // pred_region
      %s26 = ssub.s32 64, 64
      %27 = vsyncadd [#allocation6], %s26
      %s29 = sshll.u32 [#allocation5], 4
      %s30 = int_to_ptr.vmem [resolvable:$true] %s29
      %32 = dma.hbm_to_vmem [thread:$0]  %s1, 64, %s30, [#allocation6]
    $region9: #{tpu_custom_call.1} parent=1 // pred_fallthru
      _
    // Predicated region
    $region10: #{tpu_custom_call.1} parent=1 // pred_check
      _
    $region11: #{tpu_custom_call.1} parent=1 // pred_check_branch
      %34 = sbr.rel (0) target = $region13
    $region12: #{tpu_custom_call.1} parent=1 // pred_region
      %s36 = ssub.s32 1024, 1024
      %37 = vsyncadd [#allocation6], %s36
      %s38 = sshll.u32 [#allocation7], 4
      %s39 = int_to_ptr.vmem [resolvable:$true] %s38
      %44 = dma.hbm_to_vmem [thread:$0]  %s2, 1024, %s39, [#allocation6], 64, 64, 4
    $region13: #{tpu_custom_call.1} parent=1 // pred_fallthru
      _
    // Predicated region
    $region14: #{tpu_custom_call.1} parent=1 // pred_check
      _
    $region15: #{tpu_custom_call.1} parent=1 // pred_check_branch
      %46 = sbr.rel (0) target = $region17
    $region16: #{tpu_custom_call.1} parent=1 // pred_region
      _
    $region17: #{tpu_custom_call.1} parent=1 // pred_fallthru
      _
    // Predicated region
    $region18: #{tpu_custom_call.1} parent=1 // pred_check
      _
    $region19: #{tpu_custom_call.1} parent=1 // pred_check_branch
      %48 = sbr.rel (0) target = $region21
    $region20: #{tpu_custom_call.1} parent=1 // pred_region
      _
    $region21: #{tpu_custom_call.1} parent=1 // pred_fallthru
      _
    // Predicated region
    $region22: #{tpu_custom_call.1} parent=1 // pred_check
      _
    $region23: #{tpu_custom_call.1} parent=1 // pred_check_branch
      %50 = sbr.rel (0) target = $region25
    $region24: #{tpu_custom_call.1} parent=1 // pred_region
      %51 = dma.done [#allocation3], 128
    $region25: #{tpu_custom_call.1} parent=1 // pred_fallthru
      _
    // Predicated region
    $region26: #{tpu_custom_call.1} parent=1 // pred_check
      _
    $region27: #{tpu_custom_call.1} parent=1 // pred_check_branch
      %53 = sbr.rel (0) target = $region29
    $region28: #{tpu_custom_call.1} parent=1 // pred_region
      %54 = dma.done [#allocation6], 64
    $region29: #{tpu_custom_call.1} parent=1 // pred_fallthru
      _
    // Predicated region
    $region30: #{tpu_custom_call.1} parent=1 // pred_check
      _
    $region31: #{tpu_custom_call.1} parent=1 // pred_check_branch
      %56 = sbr.rel (0) target = $region33
    $region32: #{tpu_custom_call.1} parent=1 // pred_region
      %57 = dma.done [#allocation6], 1024
    $region33: #{tpu_custom_call.1} parent=1 // pred_fallthru
      _
    %v59 = vld [vmem:[#allocation2] sm:$0xff]
    %v60 = vpack.c.bf16 %v59, %v59
    %v61 = vld [vmem:[#allocation5] sm:$0xf]
    %v62 = vld [vmem:[%s3] sm:$0x1]
    %v64 = vlaneseq
    %v65 = vshrl.u32 %v64, 7
    %v66 = vsub.s32 0, %v65
    %v67 = vrot.slane %v62, %v66
    %vm69 = vcmask 64512
    %v71 = vsel %vm69, %v60, 0
    %vm73 = vcmask 1043456
    %v75 = vsel %vm73, %v61, 0
    %77 = vmatprep.subr.bf16.mxu0 0
    %78 = vmatpush1.bf16.msra.mxu0 %v75
    %79 = vmatprep.subr.bf16.mxu0 0
    %80 = vmatpush1.bf16.msra.mxu0 0
    %81 = vmatprep.subr.bf16.mxu0 0
    %82 = vmatpush1.bf16.msra.mxu0 0
    %83 = vmatprep.subr.bf16.mxu0 0
    %84 = vmatpush1.bf16.msra.mxu0 0
    %85 = vmatprep.subr.bf16.mxu0 0
    %86 = vmatpush1.bf16.msra.mxu0 0
    %87 = vmatprep.subr.bf16.mxu0 0
    %88 = vmatpush1.bf16.msra.mxu0 0
    %89 = vmatprep.subr.bf16.mxu0 0
    %90 = vmatpush1.bf16.msra.mxu0 0
    %91 = vmatprep.subr.bf16.mxu0 0
    %92 = vmatpush1.bf16.msra.mxu0 0
    %93 = vmatprep.subr.bf16.mxu0 0
    %94 = vmatpush1.bf16.msra.mxu0 0
    %95 = vmatprep.subr.bf16.mxu0 0
    %96 = vmatpush1.bf16.msra.mxu0 0
    %97 = vmatprep.subr.bf16.mxu0 0
    %98 = vmatpush1.bf16.msra.mxu0 0
    %99 = vmatprep.subr.bf16.mxu0 0
    %100 = vmatpush1.bf16.msra.mxu0 0
    %101 = vmatprep.subr.bf16.mxu0 0
    %102 = vmatpush1.bf16.msra.mxu0 0
    %103 = vmatprep.subr.bf16.mxu0 0
    %104 = vmatpush1.bf16.msra.mxu0 0
    %105 = vmatprep.subr.bf16.mxu0 0
    %106 = vmatpush1.bf16.msra.mxu0 0
    %107 = vmatprep.subr.bf16.mxu0 0
    %108 = vmatpush1.bf16.msra.mxu0 0
    %109 = vmatprep.mubr.bf16.mxu0 0
    %110 = vmatmul.mubr.bf16.gmra.mrb[0].mxu0 %v71
    %v111 = vpop.f32.mrb[0].mxu0
    %v112 = vadd.f32 %v67, %v111
    %v113 = vpop.f32.mrb[0].mxu0
    %v114 = vpop.f32.mrb[0].mxu0
    %v115 = vpop.f32.mrb[0].mxu0
    %116 = vdwg.mxu0
    %v117 = vmax.f32 %v112, 0.0
    %v118 = vpack.c.bf16 %v117, %v117
    %v119 = vld [vmem:[#allocation7] sm:$0xf]
    %v120 = vld [vmem:[#allocation7 + $0x4] sm:$0xf]
    %v121 = vld [vmem:[#allocation7 + $0x8] sm:$0xf]
    %v122 = vld [vmem:[#allocation7 + $0xc] sm:$0xf]
    %v123 = vld [vmem:[#allocation7 + $0x10] sm:$0xf]
    %v124 = vld [vmem:[#allocation7 + $0x14] sm:$0xf]
    %v125 = vld [vmem:[#allocation7 + $0x18] sm:$0xf]
    %v126 = vld [vmem:[#allocation7 + $0x1c] sm:$0xf]
    %v127 = vld [vmem:[#allocation7 + $0x20] sm:$0xf]
    %v128 = vld [vmem:[#allocation7 + $0x24] sm:$0xf]
    %v129 = vld [vmem:[#allocation7 + $0x28] sm:$0xf]
    %v130 = vld [vmem:[#allocation7 + $0x2c] sm:$0xf]
    %v131 = vld [vmem:[#allocation7 + $0x30] sm:$0xf]
    %v132 = vld [vmem:[#allocation7 + $0x34] sm:$0xf]
    %v133 = vld [vmem:[#allocation7 + $0x38] sm:$0xf]
    %v134 = vld [vmem:[#allocation7 + $0x3c] sm:$0xf]
    %v135 = vld [vmem:[%s4] sm:$0x1]
    %v137 = vlaneseq
    %v138 = vshrl.u32 %v137, 7
    %v139 = vsub.s32 0, %v138
    %v140 = vrot.slane %v135, %v139
    %v158 = vunpack.c.l.b16 %v119
    %v159 = vunpack.c.l.b16 %v120
    %v160 = vunpack.c.l.b16 %v121
    %v161 = vunpack.c.l.b16 %v122
    %v162 = vunpack.c.l.b16 %v123
    %v163 = vunpack.c.l.b16 %v124
    %v164 = vunpack.c.l.b16 %v125
    %v165 = vunpack.c.l.b16 %v126
    %v166 = vunpack.c.l.b16 %v127
    %v167 = vunpack.c.l.b16 %v128
    %v168 = vunpack.c.l.b16 %v129
    %v169 = vunpack.c.l.b16 %v130
    %v170 = vunpack.c.l.b16 %v131
    %v171 = vunpack.c.l.b16 %v132
    %v172 = vunpack.c.l.b16 %v133
    %v173 = vunpack.c.l.b16 %v134
    %v174 = vpack.c.b16 %v159, %v158
    %v175 = vpack.c.b16 %v161, %v160
    %v176 = vpack.c.b16 %v163, %v162
    %v177 = vpack.c.b16 %v165, %v164
    %v178 = vpack.c.b16 %v167, %v166
    %v179 = vpack.c.b16 %v169, %v168
    %v180 = vpack.c.b16 %v171, %v170
    %v181 = vpack.c.b16 %v173, %v172
    %190 = vmatprep.subr.bf16.mxu0 0
    %191 = vmatpush1.bf16.msra.mxu0 %v174
    %192 = vmatprep.subr.bf16.mxu0 0
    %193 = vmatpush1.bf16.msra.mxu0 %v175
    %194 = vmatprep.subr.bf16.mxu0 0
    %195 = vmatpush1.bf16.msra.mxu0 %v176
    %196 = vmatprep.subr.bf16.mxu0 0
    %197 = vmatpush1.bf16.msra.mxu0 %v177
    %198 = vmatprep.subr.bf16.mxu0 0
    %199 = vmatpush1.bf16.msra.mxu0 %v178
    %200 = vmatprep.subr.bf16.mxu0 0
    %201 = vmatpush1.bf16.msra.mxu0 %v179
    %202 = vmatprep.subr.bf16.mxu0 0
    %203 = vmatpush1.bf16.msra.mxu0 %v180
    %204 = vmatprep.subr.bf16.mxu0 0
    %205 = vmatpush1.bf16.msra.mxu0 %v181
    %206 = vmatprep.subr.bf16.mxu0 0
    %207 = vmatpush1.bf16.msra.mxu0 0
    %208 = vmatprep.subr.bf16.mxu0 0
    %209 = vmatpush1.bf16.msra.mxu0 0
    %210 = vmatprep.subr.bf16.mxu0 0
    %211 = vmatpush1.bf16.msra.mxu0 0
    %212 = vmatprep.subr.bf16.mxu0 0
    %213 = vmatpush1.bf16.msra.mxu0 0
    %214 = vmatprep.subr.bf16.mxu0 0
    %215 = vmatpush1.bf16.msra.mxu0 0
    %216 = vmatprep.subr.bf16.mxu0 0
    %217 = vmatpush1.bf16.msra.mxu0 0
    %218 = vmatprep.subr.bf16.mxu0 0
    %219 = vmatpush1.bf16.msra.mxu0 0
    %220 = vmatprep.subr.bf16.mxu0 0
    %221 = vmatpush1.bf16.msra.mxu0 0
    %222 = vmatprep.mubr.bf16.mxu0 0
    %223 = vmatmul.mubr.bf16.gmra.mrb[0].mxu0 %v118
    %v224 = vpop.f32.mrb[0].mxu0
    %v225 = vadd.f32 %v140, %v224
    %v226 = vpop.f32.mrb[0].mxu0
    %v227 = vpop.f32.mrb[0].mxu0
    %v228 = vpop.f32.mrb[0].mxu0
    %229 = vdwg.mxu0
    %230 = vst [vmem:[#allocation8] sm:$0xff] %v225
    // Predicated region
    $region34: #{tpu_custom_call.1} parent=1 // pred_check
      _
    $region35: #{tpu_custom_call.1} parent=1 // pred_check_branch
      %232 = sbr.rel (0) target = $region37
    $region36: #{tpu_custom_call.1} parent=1 // pred_region
      %s234 = ssub.s32 128, 128
      %235 = vsyncadd [#allocation4], %s234
      %s237 = sshll.u32 [#allocation8], 4
      %s238 = int_to_ptr.vmem [resolvable:$true] %s237
      %240 = dma.vmem_to_hbm [thread:$0]  %s238, 128, %s5, [#allocation4]
    $region37: #{tpu_custom_call.1} parent=1 // pred_fallthru
      _
    // Predicated region
    $region38: #{tpu_custom_call.1} parent=1 // pred_check
      _
    $region39: #{tpu_custom_call.1} parent=1 // pred_check_branch
      %242 = sbr.rel (0) target = $region41
    $region40: #{tpu_custom_call.1} parent=1 // pred_region
      %243 = dma.done [#allocation4], 128
    $region41: #{tpu_custom_call.1} parent=1 // pred_fallthru
      _
    %244 = vsyncpa [#allocation3], 1
    %245 = vsyncpa [#allocation6], 1
    %246 = vsyncpa [#allocation4], 1

// kernel: tpu_custom_call.1
$region0: #{tpu_custom_call.1}
  #allocation0 [shape = 'u32[]', space=smem, size = 0x4, offset = 0x4, fixed_abs, tag = 'smem constant byte address 0x4 - core index']
  #allocation1 [shape = 'u32[144,128]{1,0:T(1,128)}', space=vmem, size = 0x12000, scoped, tag = 'internal scratch']
  %s0 = inlined_call_operand.hbm [shape: f32[8,8], index: 0, kind: input, shape index: {}]
  %s1 = inlined_call_operand.hbm [shape: bf16[8,128], index: 1, kind: input, shape index: {}]
  %s2 = inlined_call_operand.hbm [shape: bf16[128,128], index: 2, kind: input, shape index: {}]
  %s3 = inlined_call_operand.vmem [shape: f32[1,128], index: 3, kind: input, shape index: {}]
  %s4 = inlined_call_operand.vmem [shape: f32[1,128], index: 4, kind: input, shape index: {}]
  %s5 = inlined_call_operand.hbm [shape: f32[8,128], index: 5, kind: output, shape index: {}]
  %s6 = sld [smem:[#allocation0]]
  $region42: #{tpu_custom_call.1} parent=0
    _
  %s8 = ssub.s32 1, %s6
  %s9 = scalar_select 0, %s8, %s6
  $region1: #{tpu_custom_call.1} parent=0
    #allocation2 [shape = 'u8[4096]{0}', space=vmem, size = 0x1000, scoped, tag = 'input window, operand 0, single buffered']
    #allocation3 [shape = 's32[1]{0}', space=sflag, size = 0x4, scoped, tag = 'scoped memory for tpu_custom_call.1']
    #allocation4 [shape = 's32[1]{0}', space=sflag, size = 0x4, scoped, tag = 'scoped memory for tpu_custom_call.1']
    #allocation5 [shape = 'u8[2048]{0}', space=vmem, size = 0x800, scoped, tag = 'input window, operand 1, single buffered']
    #allocation6 [shape = 's32[1]{0}', space=sflag, size = 0x4, scoped, tag = 'scoped memory for tpu_custom_call.1']
    #allocation7 [shape = 'u8[32768]{0}', space=vmem, size = 0x8000, scoped, tag = 'input window, operand 2, single buffered']
    #allocation8 [shape = 'u8[4096]{0}', space=vmem, size = 0x1000, scoped, tag = 'output window, operand 0, single buffered']
    %10 = vsyncpa [#allocation3], 0
    %11 = vsyncpa [#allocation6], 0
    %12 = vsyncpa [#allocation4], 0
    // Predicated region
    $region2: #{tpu_custom_call.1} parent=1 // pred_check
      _
    $region3: #{tpu_custom_call.1} parent=1 // pred_check_branch
      %14 = sbr.rel (0) target = $region5
    $region4: #{tpu_custom_call.1} parent=1 // pred_region
      %s16 = ssub.s32 128, 128
      %17 = vsyncadd [#allocation3], %s16
      %s19 = sshll.u32 [#allocation2], 4
      %s20 = int_to_ptr.vmem [resolvable:$true] %s19
      %22 = dma.hbm_to_vmem [thread:$0]  %s0, 128, %s20, [#allocation3]
    $region5: #{tpu_custom_call.1} parent=1 // pred_fallthru
      _
    // Predicated region
    $region6: #{tpu_custom_call.1} parent=1 // pred_check
      _
    $region7: #{tpu_custom_call.1} parent=1 // pred_check_branch
      %24 = sbr.rel (0) target = $region9
    $region8: #{tpu_custom_call.1} parent=1 // pred_region
      %s26 = ssub.s32 64, 64
      %27 = vsyncadd [#allocation6], %s26
      %s29 = sshll.u32 [#allocation5], 4
      %s30 = int_to_ptr.vmem [resolvable:$true] %s29
      %32 = dma.hbm_to_vmem [thread:$0]  %s1, 64, %s30, [#allocation6]
    $region9: #{tpu_custom_call.1} parent=1 // pred_fallthru
      _
    // Predicated region
    $region10: #{tpu_custom_call.1} parent=1 // pred_check
      _
    $region11: #{tpu_custom_call.1} parent=1 // pred_check_branch
      %34 = sbr.rel (0) target = $region13
    $region12: #{tpu_custom_call.1} parent=1 // pred_region
      %s36 = ssub.s32 1024, 1024
      %37 = vsyncadd [#allocation6], %s36
      %s38 = sshll.u32 [#allocation7], 4
      %s39 = int_to_ptr.vmem [resolvable:$true] %s38
      %44 = dma.hbm_to_vmem [thread:$0]  %s2, 1024, %s39, [#allocation6], 64, 64, 4
    $region13: #{tpu_custom_call.1} parent=1 // pred_fallthru
      _
    // Predicated region
    $region14: #{tpu_custom_call.1} parent=1 // pred_check
      _
    $region15: #{tpu_custom_call.1} parent=1 // pred_check_branch
      %46 = sbr.rel (0) target = $region17
    $region16: #{tpu_custom_call.1} parent=1 // pred_region
      _
    $region17: #{tpu_custom_call.1} parent=1 // pred_fallthru
      _
    // Predicated region
    $region18: #{tpu_custom_call.1} parent=1 // pred_check
      _
    $region19: #{tpu_custom_call.1} parent=1 // pred_check_branch
      %48 = sbr.rel (0) target = $region21
    $region20: #{tpu_custom_call.1} parent=1 // pred_region
      _
    $region21: #{tpu_custom_call.1} parent=1 // pred_fallthru
      _
    // Predicated region
    $region22: #{tpu_custom_call.1} parent=1 // pred_check
      _
    $region23: #{tpu_custom_call.1} parent=1 // pred_check_branch
      %50 = sbr.rel (0) target = $region25
    $region24: #{tpu_custom_call.1} parent=1 // pred_region
      %51 = dma.done [#allocation3], 128
    $region25: #{tpu_custom_call.1} parent=1 // pred_fallthru
      _
    // Predicated region
    $region26: #{tpu_custom_call.1} parent=1 // pred_check
      _
    $region27: #{tpu_custom_call.1} parent=1 // pred_check_branch
      %53 = sbr.rel (0) target = $region29
    $region28: #{tpu_custom_call.1} parent=1 // pred_region
      %54 = dma.done [#allocation6], 64
    $region29: #{tpu_custom_call.1} parent=1 // pred_fallthru
      _
    // Predicated region
    $region30: #{tpu_custom_call.1} parent=1 // pred_check
      _
    $region31: #{tpu_custom_call.1} parent=1 // pred_check_branch
      %56 = sbr.rel (0) target = $region33
    $region32: #{tpu_custom_call.1} parent=1 // pred_region
      %57 = dma.done [#allocation6], 1024
    $region33: #{tpu_custom_call.1} parent=1 // pred_fallthru
      _
    %v59 = vld [vmem:[#allocation2] sm:$0xff]
    %v60 = vpack.c.bf16 %v59, %v59
    %v61 = vld [vmem:[#allocation5] sm:$0xf]
    %v62 = vld [vmem:[%s3] sm:$0x1]
    %v64 = vlaneseq
    %v65 = vshrl.u32 %v64, 7
    %v66 = vsub.s32 0, %v65
    %v67 = vrot.slane %v62, %v66
    %vm69 = vcmask 64512
    %v71 = vsel %vm69, %v60, 0
    %vm73 = vcmask 1043456
    %v75 = vsel %vm73, %v61, 0
    %77 = vmatprep.subr.bf16.mxu0 0
    %78 = vmatpush1.bf16.msra.mxu0 %v75
    %79 = vmatprep.subr.bf16.mxu0 0
    %80 = vmatpush1.bf16.msra.mxu0 0
    %81 = vmatprep.subr.bf16.mxu0 0
    %82 = vmatpush1.bf16.msra.mxu0 0
    %83 = vmatprep.subr.bf16.mxu0 0
    %84 = vmatpush1.bf16.msra.mxu0 0
    %85 = vmatprep.subr.bf16.mxu0 0
    %86 = vmatpush1.bf16.msra.mxu0 0
    %87 = vmatprep.subr.bf16.mxu0 0
    %88 = vmatpush1.bf16.msra.mxu0 0
    %89 = vmatprep.subr.bf16.mxu0 0
    %90 = vmatpush1.bf16.msra.mxu0 0
    %91 = vmatprep.subr.bf16.mxu0 0
    %92 = vmatpush1.bf16.msra.mxu0 0
    %93 = vmatprep.subr.bf16.mxu0 0
    %94 = vmatpush1.bf16.msra.mxu0 0
    %95 = vmatprep.subr.bf16.mxu0 0
    %96 = vmatpush1.bf16.msra.mxu0 0
    %97 = vmatprep.subr.bf16.mxu0 0
    %98 = vmatpush1.bf16.msra.mxu0 0
    %99 = vmatprep.subr.bf16.mxu0 0
    %100 = vmatpush1.bf16.msra.mxu0 0
    %101 = vmatprep.subr.bf16.mxu0 0
    %102 = vmatpush1.bf16.msra.mxu0 0
    %103 = vmatprep.subr.bf16.mxu0 0
    %104 = vmatpush1.bf16.msra.mxu0 0
    %105 = vmatprep.subr.bf16.mxu0 0
    %106 = vmatpush1.bf16.msra.mxu0 0
    %107 = vmatprep.subr.bf16.mxu0 0
    %108 = vmatpush1.bf16.msra.mxu0 0
    %109 = vmatprep.mubr.bf16.mxu0 0
    %110 = vmatmul.mubr.bf16.gmra.mrb[0].mxu0 %v71
    %v111 = vpop.f32.mrb[0].mxu0
    %v112 = vadd.f32 %v67, %v111
    %v113 = vpop.f32.mrb[0].mxu0
    %v114 = vpop.f32.mrb[0].mxu0
    %v115 = vpop.f32.mrb[0].mxu0
    %116 = vdwg.mxu0
    %v117 = vmax.f32 %v112, 0.0
    %v118 = vpack.c.bf16 %v117, %v117
    %v119 = vld [vmem:[#allocation7] sm:$0xf]
    %v120 = vld [vmem:[#allocation7 + $0x4] sm:$0xf]
    %v121 = vld [vmem:[#allocation7 + $0x8] sm:$0xf]
    %v122 = vld [vmem:[#allocation7 + $0xc] sm:$0xf]
    %v123 = vld [vmem:[#allocation7 + $0x10] sm:$0xf]
    %v124 = vld [vmem:[#allocation7 + $0x14] sm:$0xf]
    %v125 = vld [vmem:[#allocation7 + $0x18] sm:$0xf]
    %v126 = vld [vmem:[#allocation7 + $0x1c] sm:$0xf]
    %v127 = vld [vmem:[#allocation7 + $0x20] sm:$0xf]
    %v128 = vld [vmem:[#allocation7 + $0x24] sm:$0xf]
    %v129 = vld [vmem:[#allocation7 + $0x28] sm:$0xf]
    %v130 = vld [vmem:[#allocation7 + $0x2c] sm:$0xf]
    %v131 = vld [vmem:[#allocation7 + $0x30] sm:$0xf]
    %v132 = vld [vmem:[#allocation7 + $0x34] sm:$0xf]
    %v133 = vld [vmem:[#allocation7 + $0x38] sm:$0xf]
    %v134 = vld [vmem:[#allocation7 + $0x3c] sm:$0xf]
    %v135 = vld [vmem:[%s4] sm:$0x1]
    %v137 = vlaneseq
    %v138 = vshrl.u32 %v137, 7
    %v139 = vsub.s32 0, %v138
    %v140 = vrot.slane %v135, %v139
    %v158 = vunpack.c.l.b16 %v119
    %v159 = vunpack.c.l.b16 %v120
    %v160 = vunpack.c.l.b16 %v121
    %v161 = vunpack.c.l.b16 %v122
    %v162 = vunpack.c.l.b16 %v123
    %v163 = vunpack.c.l.b16 %v124
    %v164 = vunpack.c.l.b16 %v125
    %v165 = vunpack.c.l.b16 %v126
    %v166 = vunpack.c.l.b16 %v127
    %v167 = vunpack.c.l.b16 %v128
    %v168 = vunpack.c.l.b16 %v129
    %v169 = vunpack.c.l.b16 %v130
    %v170 = vunpack.c.l.b16 %v131
    %v171 = vunpack.c.l.b16 %v132
    %v172 = vunpack.c.l.b16 %v133
    %v173 = vunpack.c.l.b16 %v134
    %v174 = vpack.c.b16 %v159, %v158
    %v175 = vpack.c.b16 %v161, %v160
    %v176 = vpack.c.b16 %v163, %v162
    %v177 = vpack.c.b16 %v165, %v164
    %v178 = vpack.c.b16 %v167, %v166
    %v179 = vpack.c.b16 %v169, %v168
    %v180 = vpack.c.b16 %v171, %v170
    %v181 = vpack.c.b16 %v173, %v172
    %190 = vmatprep.subr.bf16.mxu0 0
    %191 = vmatpush1.bf16.msra.mxu0 %v174
    %192 = vmatprep.subr.bf16.mxu0 0
    %193 = vmatpush1.bf16.msra.mxu0 %v175
    %194 = vmatprep.subr.bf16.mxu0 0
    %195 = vmatpush1.bf16.msra.mxu0 %v176
    %196 = vmatprep.subr.bf16.mxu0 0
    %197 = vmatpush1.bf16.msra.mxu0 %v177
    %198 = vmatprep.subr.bf16.mxu0 0
    %199 = vmatpush1.bf16.msra.mxu0 %v178
    %200 = vmatprep.subr.bf16.mxu0 0
    %201 = vmatpush1.bf16.msra.mxu0 %v179
    %202 = vmatprep.subr.bf16.mxu0 0
    %203 = vmatpush1.bf16.msra.mxu0 %v180
    %204 = vmatprep.subr.bf16.mxu0 0
    %205 = vmatpush1.bf16.msra.mxu0 %v181
    %206 = vmatprep.subr.bf16.mxu0 0
    %207 = vmatpush1.bf16.msra.mxu0 0
    %208 = vmatprep.subr.bf16.mxu0 0
    %209 = vmatpush1.bf16.msra.mxu0 0
    %210 = vmatprep.subr.bf16.mxu0 0
    %211 = vmatpush1.bf16.msra.mxu0 0
    %212 = vmatprep.subr.bf16.mxu0 0
    %213 = vmatpush1.bf16.msra.mxu0 0
    %214 = vmatprep.subr.bf16.mxu0 0
    %215 = vmatpush1.bf16.msra.mxu0 0
    %216 = vmatprep.subr.bf16.mxu0 0
    %217 = vmatpush1.bf16.msra.mxu0 0
    %218 = vmatprep.subr.bf16.mxu0 0
    %219 = vmatpush1.bf16.msra.mxu0 0
    %220 = vmatprep.subr.bf16.mxu0 0
    %221 = vmatpush1.bf16.msra.mxu0 0
    %222 = vmatprep.mubr.bf16.mxu0 0
    %223 = vmatmul.mubr.bf16.gmra.mrb[0].mxu0 %v118
    %v224 = vpop.f32.mrb[0].mxu0
    %v225 = vadd.f32 %v140, %v224
    %v226 = vpop.f32.mrb[0].mxu0
    %v227 = vpop.f32.mrb[0].mxu0
    %v228 = vpop.f32.mrb[0].mxu0
    %229 = vdwg.mxu0
    %230 = vst [vmem:[#allocation8] sm:$0xff] %v225
    // Predicated region
    $region34: #{tpu_custom_call.1} parent=1 // pred_check
      _
    $region35: #{tpu_custom_call.1} parent=1 // pred_check_branch
      %232 = sbr.rel (0) target = $region37
    $region36: #{tpu_custom_call.1} parent=1 // pred_region
      %s234 = ssub.s32 128, 128
      %235 = vsyncadd [#allocation4], %s234
      %s237 = sshll.u32 [#allocation8], 4
      %s238 = int_to_ptr.vmem [resolvable:$true] %s237
      %240 = dma.vmem_to_hbm [thread:$0]  %s238, 128, %s5, [#allocation4]
    $region37: #{tpu_custom_call.1} parent=1 // pred_fallthru
      _
    // Predicated region
    $region38: #{tpu_custom_call.1} parent=1 // pred_check
      _
    $region39: #{tpu_custom_call.1} parent=1 // pred_check_branch
      %242 = sbr.rel (0) target = $region41
    $region40: #{tpu_custom_call.1} parent=1 // pred_region
      %243 = dma.done [#allocation4], 128
    $region41: #{tpu_custom_call.1} parent=1 // pred_fallthru
      _
    %244 = vsyncpa [#allocation3], 1
    %245 = vsyncpa [#allocation6], 1
    %246 = vsyncpa [#allocation4], 1

</llo_original>
